<compile_context>
chip_gen: v7x
topology: tpu7x:2x2x1
jax: 0.10.0
libtpu: 0.0.40
codegen_flags: <defaults>
</compile_context>

<pallas_src>
import functools

import jax
import jax.numpy as jnp
from jax.experimental import pallas as pl
from jax.experimental.pallas import tpu as pltpu


def _act(name, x):
    if name is None:          # ACTIVATIONS[None] -> identity
        return x
    if name == "relu":
        return jnp.maximum(x, 0.0)
    if name == "tanh":
        # TODO(synk): on v6e/v7x a bf16 tanh (EUP bf16 path) would halve EUP work when
        # the kernel is MXU-bound; kept f32 for v5e safety / accuracy.
        return jnp.tanh(x)
    raise ValueError(f"unsupported activation: {name}")


def _round_up(x, m):
    return ((x + m - 1) // m) * m


# ---------------------------------------------------------------------------
# Hardware / capability queries (cached once per process)
# ---------------------------------------------------------------------------

@functools.lru_cache(maxsize=1)
def _vmem_budgets():
    """(vmem_limit_bytes, resident-estimate budget) sized for the current TPU gen."""
    try:
        cap = int(pltpu.get_tpu_info().vmem_capacity_bytes)
    except Exception:
        cap = 64 * 1024 * 1024            # unknown -> assume the tightest gen (v7x)
    # Leave headroom for compiler-internal scratch / spills:
    #   v7x (64 MiB/TC)  -> limit 56 MiB, budget ~47 MiB
    #   v5e/v6e (128 MiB) -> limit 112 MiB, budget ~95 MiB
    vmem_limit = min(cap - 8 * 1024 * 1024, (cap * 7) // 8)
    budget = int(vmem_limit * 0.85)
    return vmem_limit, budget


@functools.lru_cache(maxsize=1)
def _single_buffer_weights_supported():
    """One-time narrow probe: does this JAX/Mosaic accept pl.Buffered(1)?"""
    def _k(x_ref, w_ref, o_ref):
        o_ref[...] = x_ref[...] + w_ref[...]

    try:
        f = pl.pallas_call(
            _k,
            out_shape=jax.ShapeDtypeStruct((16, 128), jnp.float32),
            grid_spec=pltpu.PrefetchScalarGridSpec(
                num_scalar_prefetch=0,
                grid=(2,),
                in_specs=[
                    pl.BlockSpec((8, 128), lambda i: (i, 0)),
                    pl.BlockSpec((8, 128), lambda i: (0, 0),
                                 pipeline_mode=pl.Buffered(1)),
                ],
                out_specs=pl.BlockSpec((8, 128), lambda i: (i, 0)),
            ),
        )
        jax.jit(f).lower(jnp.zeros((16, 128), jnp.float32),
                         jnp.zeros((8, 128), jnp.float32)).compile()
        return True
    except Exception:
        return False


# ---------------------------------------------------------------------------
# Kernels
# ---------------------------------------------------------------------------

def _twolayer_kernel(x_ref, w2t_ref, b2_ref, w1t_ref, b1_ref, o_ref, *, act, mxu_dtype):
    # Cast x to the MXU dtype *inside* the kernel (no wrapper-side HBM pass).
    x = x_ref[...].astype(mxu_dtype)
    # e2: h = act(x @ W2^T + b2) -- f32 accumulation, f32 epilogue (v5e-safe).
    h = jnp.dot(x, w2t_ref[...], preferred_element_type=jnp.float32)
    h = _act(act, h + b2_ref[...])
    # e1: o = act(h @ W1^T + b1)
    y = jnp.dot(h.astype(mxu_dtype), w1t_ref[...], preferred_element_type=jnp.float32)
    y = _act(act, y + b1_ref[...])
    o_ref[...] = y.astype(o_ref.dtype)


def _linear_kernel(x_ref, wt_ref, b_ref, o_ref, *, act, mxu_dtype):
    # One tiled Linear+act pass (fallback path, full-K blocks so no partial-K reads).
    x = x_ref[...].astype(mxu_dtype)
    y = jnp.dot(x, wt_ref[...], preferred_element_type=jnp.float32)
    o_ref[...] = _act(act, y + b_ref[...]).astype(o_ref.dtype)


# ---------------------------------------------------------------------------
# pallas_call builders
# ---------------------------------------------------------------------------

def _build_fused_call(M, F, H_pad, tm, out_dtype, act, mxu_dtype,
                      single_buffer_weights, vmem_limit):
    # Weights/biases have a constant index_map; single-buffer them when supported so
    # resident-weight VMEM is not doubled (matters most on v7x's 64 MiB/TC).
    wkw = {"pipeline_mode": pl.Buffered(1)} if single_buffer_weights else {}
    kernel = functools.partial(_twolayer_kernel, act=act, mxu_dtype=mxu_dtype)
    return pl.pallas_call(
        kernel,
        out_shape=jax.ShapeDtypeStruct((M, H_pad), out_dtype),
        grid_spec=pltpu.PrefetchScalarGridSpec(
            num_scalar_prefetch=0,
            grid=(pl.cdiv(M, tm),),                                    # partial last block masked
            in_specs=[
                pl.BlockSpec((tm, F), lambda i: (i, 0)),               # x row-tile (native dtype)
                pl.BlockSpec((F, H_pad), lambda i: (0, 0), **wkw),     # W2^T (resident)
                pl.BlockSpec((1, H_pad), lambda i: (0, 0), **wkw),     # b2
                pl.BlockSpec((H_pad, H_pad), lambda i: (0, 0), **wkw), # W1^T (resident)
                pl.BlockSpec((1, H_pad), lambda i: (0, 0), **wkw),     # b1
            ],
            out_specs=pl.BlockSpec((tm, H_pad), lambda i: (i, 0)),     # lane-dense writeback
        ),
        compiler_params=pltpu.CompilerParams(
            dimension_semantics=("parallel",),       # shard row tiles across TCs (v7x)
            vmem_limit_bytes=vmem_limit,             # generation-aware
        ),
    )


def _tiled_linear(x2d, wt, b_row, *, act, out_dtype, mxu_dtype, budget, vmem_limit):
    """Fallback single Linear+act with M/N tiling (K kept whole per block)."""
    M, K = x2d.shape
    Npad = wt.shape[1]
    xb = x2d.dtype.itemsize
    wb = wt.dtype.itemsize
    ob = jnp.dtype(out_dtype).itemsize
    mb = jnp.dtype(mxu_dtype).itemsize

    def est(tm, tn):
        return (2 * tm * K * xb        # double-buffered x row tiles
                + 2 * K * tn * wb      # double-buffered weight column tiles
                + 2 * tm * tn * ob     # double-buffered output tiles
                + 2 * tn * 4           # bias tile (f32)
                + tm * K * mb          # in-kernel x cast
                + tm * tn * 4)         # f32 matmul result

    tm, tn = 256, min(512, Npad)
    while tn > 128 and est(tm, tn) > budget:
        tn = max(128, _round_up(tn // 2, 128))
    while tm > 16 and est(tm, tn) > budget:
        tm = max(16, _round_up(tm // 2, 16))
    # TODO(synk): add K tiling (3-D grid + f32 accumulator with pl.when init/finalize)
    # for feature dims so large that even tm=16/tn=128 full-K blocks overflow VMEM.

    kernel = functools.partial(_linear_kernel, act=act, mxu_dtype=mxu_dtype)
    return pl.pallas_call(
        kernel,
        out_shape=jax.ShapeDtypeStruct((M, Npad), out_dtype),
        grid_spec=pltpu.PrefetchScalarGridSpec(
            num_scalar_prefetch=0,
            grid=(pl.cdiv(M, tm), pl.cdiv(Npad, tn)),
            in_specs=[
                pl.BlockSpec((tm, K), lambda i, j: (i, 0)),
                pl.BlockSpec((K, tn), lambda i, j: (0, j)),
                pl.BlockSpec((1, tn), lambda i, j: (0, j)),
            ],
            out_specs=pl.BlockSpec((tm, tn), lambda i, j: (i, j)),
        ),
        compiler_params=pltpu.CompilerParams(
            dimension_semantics=("parallel", "parallel"),
            vmem_limit_bytes=vmem_limit,
        ),
    )(x2d, wt, b_row)


# ---------------------------------------------------------------------------
# Parameter preparation (do ONCE, reuse across forward calls)
# ---------------------------------------------------------------------------

def prepare_twolayer_params(params, mxu_dtype=jnp.bfloat16):
    """Transpose + cast + 128-pad the weights once (amortized across calls).

    mxu_dtype=None keeps the weights in their original dtype (full-f32 path).
    """
    w1, b1, w2, b2 = params["w1"], params["b1"], params["w2"], params["b2"]
    H, F = w1.shape                       # e1 = Linear(features, hidden): (hidden, features)
    assert w2.shape == (H, H) and F == H, "TwoLayer only composes when features == hidden"

    wdt = jnp.dtype(mxu_dtype) if mxu_dtype is not None else jnp.dtype(w2.dtype)
    H_pad = _round_up(H, 128)             # lane-dense output columns / unmasked vst

    # Zero-padding is exact: padded output columns have zero weights + zero bias, and
    # W1^T's padded K rows are zero so h's padded columns never contribute.
    w2t = jnp.pad(w2.T.astype(wdt), ((0, 0), (0, H_pad - H)))            # (F, H_pad)
    w1t = jnp.pad(w1.T.astype(wdt), ((0, H_pad - H), (0, H_pad - H)))    # (H_pad, H_pad)
    b2r = jnp.pad(b2.astype(jnp.float32)[None, :], ((0, 0), (0, H_pad - H)))
    b1r = jnp.pad(b1.astype(jnp.float32)[None, :], ((0, 0), (0, H_pad - H)))
    return {"w2t": w2t, "b2r": b2r, "w1t": w1t, "b1r": b1r,
            "features": F, "hidden": H, "mxu_dtype": wdt}
    # TODO(synk): wn=True (nn.utils.weight_norm) could be folded into w1/w2 here; not implemented.


# ---------------------------------------------------------------------------
# Forward
# ---------------------------------------------------------------------------

def _choose_row_tile(M, per_row_stream, per_row_vmem, budget_left, tile_rows):
    if tile_rows is None:
        # Per-grid-step overhead is ~0.35 us; target >= ~2 MiB streamed per step.
        tm = _round_up(max(16, (2 << 20) // max(per_row_stream, 1)), 16)
        tm = min(tm, 2048)
    else:
        tm = _round_up(max(int(tile_rows), 16), 16)
    # Keep >= 2 grid steps so both v7x TensorCores get row tiles to work on.
    tm = min(tm, max(16, _round_up(pl.cdiv(M, 2), 16)))
    # Shrink until double-buffered streams + in-kernel intermediates fit.
    while tm > 16 and tm * per_row_vmem > budget_left:
        tm = max(16, _round_up(tm // 2, 16))
    return tm


def twolayer_forward(x, params, *, act=None, out_dtype=None, tile_rows=None,
                     mxu_dtype=jnp.bfloat16):
    """x: (B, N, features) -> (B, N, hidden).

    `params` may be raw PyTorch-convention weights (w1,b1,w2,b2) or the dict returned
    by prepare_twolayer_params (preferred: prepare once, reuse across calls).
    `out_dtype` defaults to x.dtype; pass jnp.bfloat16 to halve the output HBM stream.
    """
    prepared = params if "w2t" in params else prepare_twolayer_params(params, mxu_dtype=mxu_dtype)
    w2t, b2r = prepared["w2t"], prepared["b2r"]
    w1t, b1r = prepared["w1t"], prepared["b1r"]
    F, H = prepared["features"], prepared["hidden"]
    mxu = prepared["mxu_dtype"]
    H_pad = w2t.shape[1]

    B, N, Fx = x.shape
    assert Fx == F, f"input feature dim {Fx} != params feature dim {F}"
    if out_dtype is None:
        out_dtype = x.dtype

    M = B * N
    x2d = x.reshape(M, F)                 # no wrapper-side cast/pad of the activations

    vmem_limit, budget = _vmem_budgets()
    x_bytes = jnp.dtype(x.dtype).itemsize
    out_bytes = jnp.dtype(out_dtype).itemsize
    mxu_bytes = jnp.dtype(mxu).itemsize

    # Per-row VMEM: double-buffered x/out tiles + in-kernel intermediates
    # (mxu-dtype x copy, f32 h, mxu-dtype h copy, f32 y).
    per_row_stream = F * x_bytes + H_pad * out_bytes
    per_row_vmem = 2 * per_row_stream + F * mxu_bytes + (8 + 2 * mxu_bytes) * H_pad

    single_buf = _single_buffer_weights_supported()
    wf = 1 if single_buf else 2           # budget re-checked with the real buffer factor
    w_bytes = wf * ((F * H_pad + H_pad * H_pad) * mxu_bytes + 2 * H_pad * 4)

    if w_bytes + 16 * per_row_vmem <= budget:
        tm = _choose_row_tile(M, per_row_stream, per_row_vmem, budget - w_bytes, tile_rows)
        out2d = _build_fused_call(M, F, H_pad, tm, out_dtype, act, mxu,
                                  single_buf, vmem_limit)(x2d, w2t, b2r, w1t, b1r)
    else:
        # Resident weights don't fit VMEM (e.g. H >= ~4K bf16 on v7x): fall back to two
        # chained tiled matmul+bias+act passes; intermediate kept in the MXU dtype.
        h = _tiled_linear(x2d, w2t, b2r, act=act, out_dtype=mxu, mxu_dtype=mxu,
                          budget=budget, vmem_limit=vmem_limit)
        out2d = _tiled_linear(h, w1t, b1r, act=act, out_dtype=out_dtype, mxu_dtype=mxu,
                              budget=budget, vmem_limit=vmem_limit)

    if H_pad != H:
        out2d = out2d[:, :H]
    return out2d.reshape(B, N, H)


# ---------------------------------------------------------------------------
# Init + demo
# ---------------------------------------------------------------------------

def init_twolayer_params(key, features, hidden, dtype=jnp.float32):
    """Deterministic init mirroring nn.Linear default (uniform +- 1/sqrt(fan_in))."""
    k1, k2, k3, k4 = jax.random.split(key, 4)
    bound1 = 1.0 / (features ** 0.5)
    bound2 = 1.0 / (hidden ** 0.5)
    return {
        # e1 = Linear(features, hidden): weight (hidden, features), bias (hidden,)
        "w1": jax.random.uniform(k1, (hidden, features), dtype, -bound1, bound1),
        "b1": jax.random.uniform(k2, (hidden,), dtype, -bound1, bound1),
        # e2 = Linear(hidden, hidden): weight (hidden, hidden), bias (hidden,)
        "w2": jax.random.uniform(k3, (hidden, hidden), dtype, -bound2, bound2),
        "b2": jax.random.uniform(k4, (hidden,), dtype, -bound2, bound2),
    }


if __name__ == "__main__":
    B, N = 2, 8
    features = hidden = 32   # TwoLayer's forward requires features == hidden
    act = "relu"

    key = jax.random.PRNGKey(0)
    kx, kp = jax.random.split(key)
    x = jax.random.normal(kx, (B, N, features), dtype=jnp.float32)
    raw_params = init_twolayer_params(kp, features, hidden)

    # Prepare the weights ONCE (transpose + bf16 cast + 128-pad), reuse across calls.
    params = prepare_twolayer_params(raw_params, mxu_dtype=jnp.bfloat16)

    out = twolayer_forward(x, params, act=act)
    jax.block_until_ready(out)
    assert out.shape == (B, N, hidden)

    # Plain-JAX f32 reference. MXU operands are bf16 in-kernel (f32 accumulation),
    # so use a correspondingly looser tolerance than a pure-f32 comparison.
    h_ref = _act(act, x @ raw_params["w2"].T + raw_params["b2"])
    o_ref = _act(act, h_ref @ raw_params["w1"].T + raw_params["b1"])
    assert jnp.allclose(out, o_ref, atol=5e-2, rtol=5e-2), \
        float(jnp.max(jnp.abs(out - o_ref)))

    print("KERNEL_OK")
</pallas_src>

<mosaic_0001>
module attributes {stable_mosaic.version = 11 : i64} {
  func.func @_twolayer_kernel(%arg0: i32, %arg1: memref<16x32xf32, #tpu.memory_space<vmem>>, %arg2: memref<32x128xbf16, #tpu.memory_space<vmem>>, %arg3: memref<1x128xf32, #tpu.memory_space<vmem>>, %arg4: memref<128x128xbf16, #tpu.memory_space<vmem>>, %arg5: memref<1x128xf32, #tpu.memory_space<vmem>>, %arg6: memref<16x128xf32, #tpu.memory_space<vmem>>) attributes {dimension_semantics = [#tpu.dimension_semantics<parallel>], iteration_bounds = array<i64: 1>, scalar_prefetch = 0 : i64, scratch_operands = 0 : i64, tpu.core_type = #tpu.core_type<tc>, window_params = [{transform_indices = @transform_0, window_bounds = array<i64: 16, 32>}, {pipeline_mode = #tpu.pipeline_mode<synchronous>, transform_indices = @transform_1, window_bounds = array<i64: 32, 128>}, {pipeline_mode = #tpu.pipeline_mode<synchronous>, transform_indices = @transform_2, window_bounds = array<i64: 1, 128>}, {pipeline_mode = #tpu.pipeline_mode<synchronous>, transform_indices = @transform_3, window_bounds = array<i64: 128, 128>}, {pipeline_mode = #tpu.pipeline_mode<synchronous>, transform_indices = @transform_4, window_bounds = array<i64: 1, 128>}, {transform_indices = @transform_5, window_bounds = array<i64: 16, 128>}]} {
    %c0 = arith.constant 0 : index
    %c0_0 = arith.constant 0 : index
    %0 = vector.load %arg1[%c0, %c0_0] : memref<16x32xf32, #tpu.memory_space<vmem>>, vector<16x32xf32>
    %1 = arith.truncf %0 : vector<16x32xf32> to vector<16x32xbf16>
    %c0_1 = arith.constant 0 : index
    %c0_2 = arith.constant 0 : index
    %2 = vector.load %arg2[%c0_1, %c0_2] : memref<32x128xbf16, #tpu.memory_space<vmem>>, vector<32x128xbf16>
    %cst = arith.constant dense<0.000000e+00> : vector<16x128xf32>
    %3 = tpu.matmul %1, %2, %cst {dimension_numbers = #tpu.dot_dimension_numbers<[1], [0], [0], [1], [0, 0, 1, 1], [], []>} : vector<16x32xbf16>, vector<32x128xbf16>, vector<16x128xf32> -> vector<16x128xf32>
    %c0_3 = arith.constant 0 : index
    %c0_4 = arith.constant 0 : index
    %4 = vector.load %arg3[%c0_3, %c0_4] : memref<1x128xf32, #tpu.memory_space<vmem>>, vector<1x128xf32>
    %5 = vector.broadcast %4 : vector<1x128xf32> to vector<16x128xf32>
    %6 = arith.addf %3, %5 : vector<16x128xf32>
    %cst_5 = arith.constant 0.000000e+00 : f32
    %7 = vector.broadcast %cst_5 : f32 to vector<16x128xf32>
    %8 = arith.maximumf %6, %7 : vector<16x128xf32>
    %9 = arith.truncf %8 : vector<16x128xf32> to vector<16x128xbf16>
    %c0_6 = arith.constant 0 : index
    %c0_7 = arith.constant 0 : index
    %10 = vector.load %arg4[%c0_6, %c0_7] : memref<128x128xbf16, #tpu.memory_space<vmem>>, vector<128x128xbf16>
    %cst_8 = arith.constant dense<0.000000e+00> : vector<16x128xf32>
    %11 = tpu.matmul %9, %10, %cst_8 {dimension_numbers = #tpu.dot_dimension_numbers<[1], [0], [0], [1], [0, 0, 1, 1], [], []>} : vector<16x128xbf16>, vector<128x128xbf16>, vector<16x128xf32> -> vector<16x128xf32>
    %c0_9 = arith.constant 0 : index
    %c0_10 = arith.constant 0 : index
    %12 = vector.load %arg5[%c0_9, %c0_10] : memref<1x128xf32, #tpu.memory_space<vmem>>, vector<1x128xf32>
    %13 = vector.broadcast %12 : vector<1x128xf32> to vector<16x128xf32>
    %14 = arith.addf %11, %13 : vector<16x128xf32>
    %cst_11 = arith.constant 0.000000e+00 : f32
    %15 = vector.broadcast %cst_11 : f32 to vector<16x128xf32>
    %16 = arith.maximumf %14, %15 : vector<16x128xf32>
    %c0_12 = arith.constant 0 : index
    %c0_13 = arith.constant 0 : index
    %17 = vector.load %arg6[%c0_12, %c0_13] : memref<16x128xf32, #tpu.memory_space<vmem>>, vector<16x128xf32>
    tpu.vector_store %arg6[%c0_12, %c0_13], %16 {strides = array<i32>} : memref<16x128xf32, #tpu.memory_space<vmem>>, vector<16x128xf32>,
    return
  }
  func.func @transform_0(%arg0: i32) -> (i32, i32) {
    %c0_i32 = arith.constant 0 : i32
    %c0_i32_0 = arith.constant 0 : i32
    return %arg0, %c0_i32 : i32, i32
  }
  func.func @transform_1(%arg0: i32) -> (i32, i32) {
    %c0_i32 = arith.constant 0 : i32
    %c0_i32_0 = arith.constant 0 : i32
    %c0_i32_1 = arith.constant 0 : i32
    return %c0_i32, %c0_i32_0 : i32, i32
  }
  func.func @transform_2(%arg0: i32) -> (i32, i32) {
    %c0_i32 = arith.constant 0 : i32
    %c0_i32_0 = arith.constant 0 : i32
    %c0_i32_1 = arith.constant 0 : i32
    return %c0_i32, %c0_i32_0 : i32, i32
  }
  func.func @transform_3(%arg0: i32) -> (i32, i32) {
    %c0_i32 = arith.constant 0 : i32
    %c0_i32_0 = arith.constant 0 : i32
    %c0_i32_1 = arith.constant 0 : i32
    return %c0_i32, %c0_i32_0 : i32, i32
  }
  func.func @transform_4(%arg0: i32) -> (i32, i32) {
    %c0_i32 = arith.constant 0 : i32
    %c0_i32_0 = arith.constant 0 : i32
    %c0_i32_1 = arith.constant 0 : i32
    return %c0_i32, %c0_i32_0 : i32, i32
  }
  func.func @transform_5(%arg0: i32) -> (i32, i32) {
    %c0_i32 = arith.constant 0 : i32
    %c0_i32_0 = arith.constant 0 : i32
    return %arg0, %c0_i32 : i32, i32
  }
}

</mosaic_0001>

<llo_original>
// kernel: tpu_custom_call.1
$region0: #{tpu_custom_call.1}
  #allocation0 [shape = 'u32[]', space=smem, size = 0x4, offset = 0x4, fixed_abs, tag = 'smem constant byte address 0x4 - core index']
  #allocation1 [shape = 'u32[144,128]{1,0:T(1,128)}', space=vmem, size = 0x12000, scoped, tag = 'internal scratch']
  %s0 = inlined_call_operand.hbm [shape: f32[16,32], index: 0, kind: input, shape index: {}]
  %s1 = inlined_call_operand.hbm [shape: bf16[32,128], index: 1, kind: input, shape index: {}]
  %s2 = inlined_call_operand.vmem [shape: f32[1,128], index: 2, kind: input, shape index: {}]
  %s3 = inlined_call_operand.hbm [shape: bf16[128,128], index: 3, kind: input, shape index: {}]
  %s4 = inlined_call_operand.vmem [shape: f32[1,128], index: 4, kind: input, shape index: {}]
  %s5 = inlined_call_operand.hbm [shape: f32[16,128], index: 5, kind: output, shape index: {}]
  %s6 = sld [smem:[#allocation0]]
  $region42: #{tpu_custom_call.1} parent=0
    _
  %s8 = ssub.s32 1, %s6
  %s9 = scalar_select 0, %s8, %s6
  $region1: #{tpu_custom_call.1} parent=0
    #allocation2 [shape = 'u8[8192]{0}', space=vmem, size = 0x2000, scoped, tag = 'input window, operand 0, single buffered']
    #allocation3 [shape = 's32[1]{0}', space=sflag, size = 0x4, scoped, tag = 'scoped memory for tpu_custom_call.1']
    #allocation4 [shape = 's32[1]{0}', space=sflag, size = 0x4, scoped, tag = 'scoped memory for tpu_custom_call.1']
    #allocation5 [shape = 'u8[8192]{0}', space=vmem, size = 0x2000, scoped, tag = 'input window, operand 1, single buffered']
    #allocation6 [shape = 's32[1]{0}', space=sflag, size = 0x4, scoped, tag = 'scoped memory for tpu_custom_call.1']
    #allocation7 [shape = 'u8[32768]{0}', space=vmem, size = 0x8000, scoped, tag = 'input window, operand 3, single buffered']
    #allocation8 [shape = 'u8[8192]{0}', space=vmem, size = 0x2000, scoped, tag = 'output window, operand 0, single buffered']
    %10 = vsyncpa [#allocation3], 0
    %11 = vsyncpa [#allocation6], 0
    %12 = vsyncpa [#allocation4], 0
    // Predicated region
    $region2: #{tpu_custom_call.1} parent=1 // pred_check
      _
    $region3: #{tpu_custom_call.1} parent=1 // pred_check_branch
      %14 = sbr.rel (0) target = $region5
    $region4: #{tpu_custom_call.1} parent=1 // pred_region
      %s16 = ssub.s32 256, 256
      %17 = vsyncadd [#allocation3], %s16
      %s18 = sshll.u32 [#allocation2], 4
      %s19 = int_to_ptr.vmem [resolvable:$true] %s18
      %24 = dma.hbm_to_vmem [thread:$0]  %s0, 256, %s19, [#allocation3], 128, 128, 8
    $region5: #{tpu_custom_call.1} parent=1 // pred_fallthru
      _
    // Predicated region
    $region6: #{tpu_custom_call.1} parent=1 // pred_check
      _
    $region7: #{tpu_custom_call.1} parent=1 // pred_check_branch
      %26 = sbr.rel (0) target = $region9
    $region8: #{tpu_custom_call.1} parent=1 // pred_region
      %s28 = ssub.s32 256, 256
      %29 = vsyncadd [#allocation6], %s28
      %s30 = sshll.u32 [#allocation5], 4
      %s31 = int_to_ptr.vmem [resolvable:$true] %s30
      %36 = dma.hbm_to_vmem [thread:$0]  %s1, 256, %s31, [#allocation6], 64, 64, 4
    $region9: #{tpu_custom_call.1} parent=1 // pred_fallthru
      _
    // Predicated region
    $region10: #{tpu_custom_call.1} parent=1 // pred_check
      _
    $region11: #{tpu_custom_call.1} parent=1 // pred_check_branch
      %38 = sbr.rel (0) target = $region13
    $region12: #{tpu_custom_call.1} parent=1 // pred_region
      _
    $region13: #{tpu_custom_call.1} parent=1 // pred_fallthru
      _
    // Predicated region
    $region14: #{tpu_custom_call.1} parent=1 // pred_check
      _
    $region15: #{tpu_custom_call.1} parent=1 // pred_check_branch
      %40 = sbr.rel (0) target = $region17
    $region16: #{tpu_custom_call.1} parent=1 // pred_region
      %s42 = ssub.s32 1024, 1024
      %43 = vsyncadd [#allocation6], %s42
      %s44 = sshll.u32 [#allocation7], 4
      %s45 = int_to_ptr.vmem [resolvable:$true] %s44
      %50 = dma.hbm_to_vmem [thread:$0]  %s3, 1024, %s45, [#allocation6], 64, 64, 4
    $region17: #{tpu_custom_call.1} parent=1 // pred_fallthru
      _
    // Predicated region
    $region18: #{tpu_custom_call.1} parent=1 // pred_check
      _
    $region19: #{tpu_custom_call.1} parent=1 // pred_check_branch
      %52 = sbr.rel (0) target = $region21
    $region20: #{tpu_custom_call.1} parent=1 // pred_region
      _
    $region21: #{tpu_custom_call.1} parent=1 // pred_fallthru
      _
    // Predicated region
    $region22: #{tpu_custom_call.1} parent=1 // pred_check
      _
    $region23: #{tpu_custom_call.1} parent=1 // pred_check_branch
      %54 = sbr.rel (0) target = $region25
    $region24: #{tpu_custom_call.1} parent=1 // pred_region
      %55 = dma.done [#allocation3], 256
    $region25: #{tpu_custom_call.1} parent=1 // pred_fallthru
      _
    // Predicated region
    $region26: #{tpu_custom_call.1} parent=1 // pred_check
      _
    $region27: #{tpu_custom_call.1} parent=1 // pred_check_branch
      %57 = sbr.rel (0) target = $region29
    $region28: #{tpu_custom_call.1} parent=1 // pred_region
      %58 = dma.done [#allocation6], 256
    $region29: #{tpu_custom_call.1} parent=1 // pred_fallthru
      _
    // Predicated region
    $region30: #{tpu_custom_call.1} parent=1 // pred_check
      _
    $region31: #{tpu_custom_call.1} parent=1 // pred_check_branch
      %60 = sbr.rel (0) target = $region33
    $region32: #{tpu_custom_call.1} parent=1 // pred_region
      %61 = dma.done [#allocation6], 1024
    $region33: #{tpu_custom_call.1} parent=1 // pred_fallthru
      _
    %v63 = vld [vmem:[#allocation2] sm:$0xff]
    %v64 = vld [vmem:[#allocation2 + $0x8] sm:$0xff]
    %v65 = vpack.c.bf16 %v64, %v63
    %v66 = vld [vmem:[#allocation5] sm:$0xf]
    %v67 = vld [vmem:[#allocation5 + $0x4] sm:$0xf]
    %v68 = vld [vmem:[#allocation5 + $0x8] sm:$0xf]
    %v69 = vld [vmem:[#allocation5 + $0xc] sm:$0xf]
    %v70 = vld [vmem:[%s2] sm:$0x1]
    %v72 = vlaneseq
    %v73 = vshrl.u32 %v72, 7
    %v74 = vsub.s32 0, %v73
    %v75 = vrot.slane %v70, %v74
    %v81 = vunpack.c.l.b16 %v66
    %v82 = vunpack.c.l.b16 %v67
    %v83 = vunpack.c.l.b16 %v68
    %v84 = vunpack.c.l.b16 %v69
    %v85 = vpack.c.b16 %v82, %v81
    %v86 = vpack.c.b16 %v84, %v83
    %vm89 = vcmask 261120
    %v91 = vsel %vm89, %v65, 0
    %93 = vmatprep.subr.bf16.mxu0 0
    %94 = vmatpush1.bf16.msra.mxu0 %v85
    %95 = vmatprep.subr.bf16.mxu0 0
    %96 = vmatpush1.bf16.msra.mxu0 %v86
    %97 = vmatprep.subr.bf16.mxu0 0
    %98 = vmatpush1.bf16.msra.mxu0 0
    %99 = vmatprep.subr.bf16.mxu0 0
    %100 = vmatpush1.bf16.msra.mxu0 0
    %101 = vmatprep.subr.bf16.mxu0 0
    %102 = vmatpush1.bf16.msra.mxu0 0
    %103 = vmatprep.subr.bf16.mxu0 0
    %104 = vmatpush1.bf16.msra.mxu0 0
    %105 = vmatprep.subr.bf16.mxu0 0
    %106 = vmatpush1.bf16.msra.mxu0 0
    %107 = vmatprep.subr.bf16.mxu0 0
    %108 = vmatpush1.bf16.msra.mxu0 0
    %109 = vmatprep.subr.bf16.mxu0 0
    %110 = vmatpush1.bf16.msra.mxu0 0
    %111 = vmatprep.subr.bf16.mxu0 0
    %112 = vmatpush1.bf16.msra.mxu0 0
    %113 = vmatprep.subr.bf16.mxu0 0
    %114 = vmatpush1.bf16.msra.mxu0 0
    %115 = vmatprep.subr.bf16.mxu0 0
    %116 = vmatpush1.bf16.msra.mxu0 0
    %117 = vmatprep.subr.bf16.mxu0 0
    %118 = vmatpush1.bf16.msra.mxu0 0
    %119 = vmatprep.subr.bf16.mxu0 0
    %120 = vmatpush1.bf16.msra.mxu0 0
    %121 = vmatprep.subr.bf16.mxu0 0
    %122 = vmatpush1.bf16.msra.mxu0 0
    %123 = vmatprep.subr.bf16.mxu0 0
    %124 = vmatpush1.bf16.msra.mxu0 0
    %125 = vmatprep.mubr.bf16.mxu0 0
    %126 = vmatmul.mubr.bf16.gmra.mrb[0].mxu0 %v91
    %v127 = vpop.f32.mrb[0].mxu0
    %v128 = vadd.f32 %v75, %v127
    %v129 = vpop.f32.mrb[0].mxu0
    %v130 = vpop.f32.mrb[0].mxu0
    %v131 = vadd.f32 %v75, %v130
    %v132 = vpop.f32.mrb[0].mxu0
    %133 = vdwg.mxu0
    %v134 = vmax.f32 %v128, 0.0
    %v135 = vmax.f32 %v131, 0.0
    %v136 = vpack.c.bf16 %v135, %v134
    %v137 = vld [vmem:[#allocation7] sm:$0xf]
    %v138 = vld [vmem:[#allocation7 + $0x4] sm:$0xf]
    %v139 = vld [vmem:[#allocation7 + $0x8] sm:$0xf]
    %v140 = vld [vmem:[#allocation7 + $0xc] sm:$0xf]
    %v141 = vld [vmem:[#allocation7 + $0x10] sm:$0xf]
    %v142 = vld [vmem:[#allocation7 + $0x14] sm:$0xf]
    %v143 = vld [vmem:[#allocation7 + $0x18] sm:$0xf]
    %v144 = vld [vmem:[#allocation7 + $0x1c] sm:$0xf]
    %v145 = vld [vmem:[#allocation7 + $0x20] sm:$0xf]
    %v146 = vld [vmem:[#allocation7 + $0x24] sm:$0xf]
    %v147 = vld [vmem:[#allocation7 + $0x28] sm:$0xf]
    %v148 = vld [vmem:[#allocation7 + $0x2c] sm:$0xf]
    %v149 = vld [vmem:[#allocation7 + $0x30] sm:$0xf]
    %v150 = vld [vmem:[#allocation7 + $0x34] sm:$0xf]
    %v151 = vld [vmem:[#allocation7 + $0x38] sm:$0xf]
    %v152 = vld [vmem:[#allocation7 + $0x3c] sm:$0xf]
    %v153 = vld [vmem:[%s4] sm:$0x1]
    %v155 = vlaneseq
    %v156 = vshrl.u32 %v155, 7
    %v157 = vsub.s32 0, %v156
    %v158 = vrot.slane %v153, %v157
    %v176 = vunpack.c.l.b16 %v137
    %v177 = vunpack.c.l.b16 %v138
    %v178 = vunpack.c.l.b16 %v139
    %v179 = vunpack.c.l.b16 %v140
    %v180 = vunpack.c.l.b16 %v141
    %v181 = vunpack.c.l.b16 %v142
    %v182 = vunpack.c.l.b16 %v143
    %v183 = vunpack.c.l.b16 %v144
    %v184 = vunpack.c.l.b16 %v145
    %v185 = vunpack.c.l.b16 %v146
    %v186 = vunpack.c.l.b16 %v147
    %v187 = vunpack.c.l.b16 %v148
    %v188 = vunpack.c.l.b16 %v149
    %v189 = vunpack.c.l.b16 %v150
    %v190 = vunpack.c.l.b16 %v151
    %v191 = vunpack.c.l.b16 %v152
    %v192 = vpack.c.b16 %v177, %v176
    %v193 = vpack.c.b16 %v179, %v178
    %v194 = vpack.c.b16 %v181, %v180
    %v195 = vpack.c.b16 %v183, %v182
    %v196 = vpack.c.b16 %v185, %v184
    %v197 = vpack.c.b16 %v187, %v186
    %v198 = vpack.c.b16 %v189, %v188
    %v199 = vpack.c.b16 %v191, %v190
    %208 = vmatprep.subr.bf16.mxu0 0
    %209 = vmatpush1.bf16.msra.mxu0 %v192
    %210 = vmatprep.subr.bf16.mxu0 0
    %211 = vmatpush1.bf16.msra.mxu0 %v193
    %212 = vmatprep.subr.bf16.mxu0 0
    %213 = vmatpush1.bf16.msra.mxu0 %v194
    %214 = vmatprep.subr.bf16.mxu0 0
    %215 = vmatpush1.bf16.msra.mxu0 %v195
    %216 = vmatprep.subr.bf16.mxu0 0
    %217 = vmatpush1.bf16.msra.mxu0 %v196
    %218 = vmatprep.subr.bf16.mxu0 0
    %219 = vmatpush1.bf16.msra.mxu0 %v197
    %220 = vmatprep.subr.bf16.mxu0 0
    %221 = vmatpush1.bf16.msra.mxu0 %v198
    %222 = vmatprep.subr.bf16.mxu0 0
    %223 = vmatpush1.bf16.msra.mxu0 %v199
    %224 = vmatprep.subr.bf16.mxu0 0
    %225 = vmatpush1.bf16.msra.mxu0 0
    %226 = vmatprep.subr.bf16.mxu0 0
    %227 = vmatpush1.bf16.msra.mxu0 0
    %228 = vmatprep.subr.bf16.mxu0 0
    %229 = vmatpush1.bf16.msra.mxu0 0
    %230 = vmatprep.subr.bf16.mxu0 0
    %231 = vmatpush1.bf16.msra.mxu0 0
    %232 = vmatprep.subr.bf16.mxu0 0
    %233 = vmatpush1.bf16.msra.mxu0 0
    %234 = vmatprep.subr.bf16.mxu0 0
    %235 = vmatpush1.bf16.msra.mxu0 0
    %236 = vmatprep.subr.bf16.mxu0 0
    %237 = vmatpush1.bf16.msra.mxu0 0
    %238 = vmatprep.subr.bf16.mxu0 0
    %239 = vmatpush1.bf16.msra.mxu0 0
    %240 = vmatprep.mubr.bf16.mxu0 0
    %241 = vmatmul.mubr.bf16.gmra.mrb[0].mxu0 %v136
    %v242 = vpop.f32.mrb[0].mxu0
    %v243 = vadd.f32 %v158, %v242
    %v244 = vpop.f32.mrb[0].mxu0
    %v245 = vpop.f32.mrb[0].mxu0
    %v246 = vadd.f32 %v158, %v245
    %v247 = vpop.f32.mrb[0].mxu0
    %248 = vdwg.mxu0
    %v249 = vmax.f32 %v243, 0.0
    %v250 = vmax.f32 %v246, 0.0
    %251 = vst [vmem:[#allocation8] sm:$0xff] %v249
    %252 = vst [vmem:[#allocation8 + $0x8] sm:$0xff] %v250
    // Predicated region
    $region34: #{tpu_custom_call.1} parent=1 // pred_check
      _
    $region35: #{tpu_custom_call.1} parent=1 // pred_check_branch
      %254 = sbr.rel (0) target = $region37
    $region36: #{tpu_custom_call.1} parent=1 // pred_region
      %s256 = ssub.s32 256, 256
      %257 = vsyncadd [#allocation4], %s256
      %s258 = sshll.u32 [#allocation8], 4
      %s259 = int_to_ptr.vmem [resolvable:$true] %s258
      %264 = dma.vmem_to_hbm [thread:$0]  %s259, 256, %s5, [#allocation4], 128, 128, 8
    $region37: #{tpu_custom_call.1} parent=1 // pred_fallthru
      _
    // Predicated region
    $region38: #{tpu_custom_call.1} parent=1 // pred_check
      _
    $region39: #{tpu_custom_call.1} parent=1 // pred_check_branch
      %266 = sbr.rel (0) target = $region41
    $region40: #{tpu_custom_call.1} parent=1 // pred_region
      %267 = dma.done [#allocation4], 256
    $region41: #{tpu_custom_call.1} parent=1 // pred_fallthru
      _
    %268 = vsyncpa [#allocation3], 1
    %269 = vsyncpa [#allocation6], 1
    %270 = vsyncpa [#allocation4], 1

</llo_original>
